<compile_context>
chip_gen: v6e
topology: v6e:2x2x1
jax: 0.10.0
libtpu: 0.0.40
codegen_flags: <defaults>
</compile_context>

<pallas_src>
import math
import functools

import jax
import jax.numpy as jnp
from jax import lax
from jax.experimental import pallas as pl
from jax.experimental.pallas import tpu as pltpu


def _vit_attention_kernel(x_ref, wqkv_ref, bqkv_ref, wo_ref, bo_ref,
                          out_ref, qkv_ref, ctx_ref, *,
                          num_heads, head_dim, heads_per_group,
                          q_block, seq_len, mm_dtype):
    """Grid = (batch, q_tile). qi axis is 'arbitrary' so qkv_ref persists."""
    D = num_heads * head_dim
    gw = heads_per_group * head_dim               # group width (lane-aligned slab)
    n_groups = num_heads // heads_per_group

    # ---- Fused QKV projection: computed once per batch row, cached in VMEM. ----
    @pl.when(pl.program_id(1) == 0)
    def _():
        x = x_ref[0].astype(mm_dtype)                                    # (S, D)
        qkv = jnp.dot(x, wqkv_ref[...],
                      preferred_element_type=jnp.float32) + bqkv_ref[...]
        qkv_ref[...] = qkv.astype(qkv_ref.dtype)                         # (S, 3D)

    q_start = pl.multiple_of(pl.program_id(1) * q_block, q_block)

    # ---- Per-head-group attention (group width = heads_per_group * head_dim). ----
    for g in range(n_groups):
        c0 = g * gw
        q_slab = qkv_ref[pl.ds(q_start, q_block), c0:c0 + gw]            # (TQ, gw)
        k_slab = qkv_ref[:, D + c0:D + c0 + gw]                          # (S,  gw)
        v_slab = qkv_ref[:, 2 * D + c0:2 * D + c0 + gw]                  # (S,  gw)

        ctx_parts = []
        for hh in range(heads_per_group):
            sl = slice(hh * head_dim, (hh + 1) * head_dim)
            qh = q_slab[:, sl]                                           # (TQ, hd)
            kh = k_slab[:, sl]                                           # (S,  hd)
            vh = v_slab[:, sl]                                           # (S,  hd)

            # Contract last dims -> no kh.T materialization. Scale is folded
            # into the query weight/bias, so no per-score multiply here.
            scores = lax.dot_general(qh, kh, (((1,), (1,)), ((), ())),
                                     preferred_element_type=jnp.float32)  # (TQ, S)

            # Softmax in f32 (attention dropout: eval-mode identity).
            m = jnp.max(scores, axis=-1, keepdims=True)
            e = jnp.exp(scores - m)
            inv = pl.reciprocal(jnp.sum(e, axis=-1, keepdims=True), approx=True)
            probs = (e * inv).astype(mm_dtype)

            ctx_parts.append(jnp.dot(probs, vh,
                                     preferred_element_type=jnp.float32))  # (TQ, hd)

        ctx = ctx_parts[0] if len(ctx_parts) == 1 else jnp.concatenate(ctx_parts, axis=-1)
        ctx_ref[:, c0:c0 + gw] = ctx            # one lane-dense store per group

    # ---- ViTSelfOutput.dense (hidden dropout: eval-mode identity). ----
    out = jnp.dot(ctx_ref[...].astype(mm_dtype), wo_ref[...],
                  preferred_element_type=jnp.float32) + bo_ref[...]
    out_ref[0] = out.astype(out_ref.dtype)


def prepare_vit_attention_params(params, num_heads, mm_dtype=jnp.bfloat16):
    """One-time weight prep (hoist out of the per-forward path and cache).

    params: torch-layout weights (out, in) + biases for query/key/value/output.
    Returns dict with fused (D, 3D) QKV weight (scale folded into Q), f32
    biases, and the (D, D) output weight, all ready for the kernel.
    """
    f32 = jnp.float32
    D = params["wq"].shape[0]
    head_dim = D // num_heads
    scale = 1.0 / math.sqrt(head_dim)

    wq = params["wq"].astype(f32).T * scale          # (in, out), scale folded
    wk = params["wk"].astype(f32).T
    wv = params["wv"].astype(f32).T
    wqkv = jnp.concatenate([wq, wk, wv], axis=1).astype(mm_dtype)          # (D, 3D)
    bqkv = jnp.concatenate([params["bq"].astype(f32) * scale,
                            params["bk"].astype(f32),
                            params["bv"].astype(f32)]).reshape(1, 3 * D)   # f32
    wo = params["wo"].astype(f32).T.astype(mm_dtype)                        # (D, D)
    bo = params["bo"].astype(f32).reshape(1, D)
    return {"wqkv": wqkv, "bqkv": bqkv, "wo": wo, "bo": bo}


def vit_attention(hidden_states, prepared, *, num_heads, q_block=None):
    """hidden_states: (B, S, D). prepared: output of prepare_vit_attention_params.

    Pure / jittable: no host syncs, no per-call weight preparation.
    Default q_block=S (fully fused, best for single-TC v5e/v6e). On v7x with
    small batch, pass q_block=S//2 (multiple of 8) to give the two TensorCores
    balanced parallel work; K/V are NOT recomputed per tile (VMEM-cached).
    """
    B, S, D = hidden_states.shape
    head_dim = D // num_heads
    mm_dtype = jnp.dtype(prepared["wqkv"].dtype)
    out_dtype = hidden_states.dtype

    if q_block is None:
        q_block = S                           # fully fused single tile per batch row
    assert S % q_block == 0, "pad S to a multiple of q_block in the wrapper"
    assert q_block == S or q_block % 8 == 0, "q_block must be S or a multiple of 8"
    nq = S // q_block

    # Lane-aligned head grouping: e.g. head_dim=64 -> pairs (128-wide slabs).
    if head_dim <= 128 and 128 % head_dim == 0:
        heads_per_group = math.gcd(num_heads, 128 // head_dim)
    else:
        heads_per_group = 1
    gw = heads_per_group * head_dim

    x = hidden_states.astype(mm_dtype)

    # Honest VMEM estimate (weights double-buffered by the default pipeline,
    # though constant index_map means they are only DMA'd once).
    isz = jnp.dtype(mm_dtype).itemsize
    osz = jnp.dtype(out_dtype).itemsize
    est = (2 * (D * 3 * D + D * D) * isz + 2 * 4 * D * 4      # weights + biases
           + 2 * S * D * isz                                  # input block x2
           + 2 * q_block * D * osz                            # output block x2
           + S * 3 * D * isz + q_block * D * 4                # qkv + ctx scratch
           + 3 * q_block * S * 4                              # scores / exp / probs
           + 2 * S * gw * isz + 2 * q_block * gw * 4)         # live slabs per group
    # Cap at 48 MiB: safe on v7x (64 MiB/TC physical) and plenty for ViT-Base.
    # TODO(synk): on v5e/v6e (128 MiB VMEM) allow a higher cap for very long S.
    vmem_limit = int(min(48 * 2 ** 20, max(est + (4 << 20), 16 * 2 ** 20)))

    kernel = functools.partial(
        _vit_attention_kernel,
        num_heads=num_heads, head_dim=head_dim, heads_per_group=heads_per_group,
        q_block=q_block, seq_len=S, mm_dtype=mm_dtype)

    x_spec = pl.BlockSpec((1, S, D), lambda b, qi: (b, 0, 0))
    w_qkv_spec = pl.BlockSpec((D, 3 * D), lambda b, qi: (0, 0))
    b_qkv_spec = pl.BlockSpec((1, 3 * D), lambda b, qi: (0, 0))
    w_o_spec = pl.BlockSpec((D, D), lambda b, qi: (0, 0))
    b_o_spec = pl.BlockSpec((1, D), lambda b, qi: (0, 0))
    out_spec = pl.BlockSpec((1, q_block, D), lambda b, qi: (b, qi, 0))

    return pl.pallas_call(
        kernel,
        out_shape=jax.ShapeDtypeStruct((B, S, D), out_dtype),
        grid=(B, nq),
        in_specs=[x_spec, w_qkv_spec, b_qkv_spec, w_o_spec, b_o_spec],
        out_specs=out_spec,
        scratch_shapes=[
            pltpu.VMEM((S, 3 * D), mm_dtype),      # cached fused QKV activations
            pltpu.VMEM((q_block, D), jnp.float32),  # per-tile context slab
        ],
        compiler_params=pltpu.CompilerParams(
            # qi must be "arbitrary": QKV scratch is filled at qi==0 and reused.
            dimension_semantics=("parallel", "arbitrary"),
            vmem_limit_bytes=vmem_limit),
    )(x, prepared["wqkv"], prepared["bqkv"], prepared["wo"], prepared["bo"])


def vit_attention_reference(x, params, num_heads):
    """Pure-JAX reference mirroring the PyTorch forward (eval mode)."""
    B, S, D = x.shape
    head_dim = D // num_heads

    def linear(h, w, b):
        return jnp.einsum("bsd,ed->bse", h, w) + b

    q = linear(x, params["wq"], params["bq"])
    k = linear(x, params["wk"], params["bk"])
    v = linear(x, params["wv"], params["bv"])

    def split_heads(t):  # (B,S,D) -> (B,H,S,hd)
        return t.reshape(B, S, num_heads, head_dim).transpose(0, 2, 1, 3)

    qh, kh, vh = split_heads(q), split_heads(k), split_heads(v)
    scores = jnp.einsum("bhqd,bhkd->bhqk", qh, kh) / math.sqrt(head_dim)
    probs = jax.nn.softmax(scores, axis=-1)
    ctx = jnp.einsum("bhqk,bhkd->bhqd", probs, vh)
    ctx = ctx.transpose(0, 2, 1, 3).reshape(B, S, D)
    return jnp.einsum("bsd,ed->bse", ctx, params["wo"]) + params["bo"]


if __name__ == "__main__":
    # Small ViT-like config: hidden=32, heads=4 (head_dim=8), seq=16, batch=2.
    # For real perf use ViT-Base dims (S=197 padded to 208, D=768, H=12) in bf16.
    B, S, D, H = 2, 16, 32, 4

    key = jax.random.PRNGKey(0)
    keys = jax.random.split(key, 9)
    init = lambda k, shape: (0.02 * jax.random.normal(k, shape)).astype(jnp.float32)

    params = {
        "wq": init(keys[0], (D, D)), "bq": init(keys[1], (D,)),
        "wk": init(keys[2], (D, D)), "bk": init(keys[3], (D,)),
        "wv": init(keys[4], (D, D)), "bv": init(keys[5], (D,)),
        "wo": init(keys[6], (D, D)), "bo": init(keys[7], (D,)),
    }
    x = jax.random.normal(keys[8], (B, S, D), dtype=jnp.float32)

    ref = vit_attention_reference(x, params, num_heads=H)

    # 1) bf16 MXU operands (default), fully fused single tile per batch row.
    prep_bf16 = prepare_vit_attention_params(params, num_heads=H)
    fwd = jax.jit(functools.partial(vit_attention, num_heads=H))
    out_bf = jax.block_until_ready(fwd(x, prep_bf16))
    assert out_bf.shape == (B, S, D)
    assert jnp.allclose(out_bf, ref, atol=3e-2, rtol=3e-2), (
        f"bf16 fused path max abs err {jnp.max(jnp.abs(out_bf - ref))}")

    # 2) f32 MXU operands, fully fused (tight tolerance check).
    prep_f32 = prepare_vit_attention_params(params, num_heads=H, mm_dtype=jnp.float32)
    out_f32 = jax.block_until_ready(fwd(x, prep_f32))
    assert jnp.allclose(out_f32, ref, atol=2e-3, rtol=2e-3), (
        f"f32 fused path max abs err {jnp.max(jnp.abs(out_f32 - ref))}")

    # 3) bf16, query-tiled (exercises the VMEM-cached-QKV + 'arbitrary' qi path).
    fwd_qt = jax.jit(functools.partial(vit_attention, num_heads=H, q_block=8))
    out_qt = jax.block_until_ready(fwd_qt(x, prep_bf16))
    assert jnp.allclose(out_qt, ref, atol=3e-2, rtol=3e-2), (
        f"q-tiled path max abs err {jnp.max(jnp.abs(out_qt - ref))}")

    print("KERNEL_OK")
</pallas_src>

<mosaic_0001>
module attributes {stable_mosaic.version = 11 : i64} {
  func.func @_vit_attention_kernel(%arg0: i32, %arg1: i32, %arg2: memref<1x16x32xbf16, #tpu.memory_space<vmem>>, %arg3: memref<32x96xbf16, #tpu.memory_space<vmem>>, %arg4: memref<1x96xf32, #tpu.memory_space<vmem>>, %arg5: memref<32x32xbf16, #tpu.memory_space<vmem>>, %arg6: memref<1x32xf32, #tpu.memory_space<vmem>>, %arg7: memref<1x16x32xf32, #tpu.memory_space<vmem>>, %arg8: memref<16x96xbf16, #tpu.memory_space<vmem>>, %arg9: memref<16x32xf32, #tpu.memory_space<vmem>>) attributes {dimension_semantics = [#tpu.dimension_semantics<parallel>, #tpu.dimension_semantics<arbitrary>], iteration_bounds = array<i64: 2, 1>, scalar_prefetch = 0 : i64, scratch_operands = 2 : i64, tpu.core_type = #tpu.core_type<tc>, window_params = [{transform_indices = @transform_0, window_bounds = array<i64: 1, 16, 32>}, {pipeline_mode = #tpu.pipeline_mode<synchronous>, transform_indices = @transform_1, window_bounds = array<i64: 32, 96>}, {pipeline_mode = #tpu.pipeline_mode<synchronous>, transform_indices = @transform_2, window_bounds = array<i64: 1, 96>}, {pipeline_mode = #tpu.pipeline_mode<synchronous>, transform_indices = @transform_3, window_bounds = array<i64: 32, 32>}, {pipeline_mode = #tpu.pipeline_mode<synchronous>, transform_indices = @transform_4, window_bounds = array<i64: 1, 32>}, {transform_indices = @transform_5, window_bounds = array<i64: 1, 16, 32>}]} {
    %c0_i32 = arith.constant 0 : i32
    %0 = arith.cmpi eq, %arg1, %c0_i32 : i32
    %1 = arith.extui %0 : i1 to i32
    %c0_i32_0 = arith.constant 0 : i32
    %2 = arith.cmpi ne, %1, %c0_i32_0 : i32
    scf.if %2 {
      %c0_30 = arith.constant 0 : index
      %c0_31 = arith.constant 0 : index
      %c0_32 = arith.constant 0 : index
      %85 = vector.load %arg2[%c0_30, %c0_31, %c0_32] : memref<1x16x32xbf16, #tpu.memory_space<vmem>>, vector<1x16x32xbf16>
      %86 = vector.shape_cast %85 : vector<1x16x32xbf16> to vector<16x32xbf16>
      %c0_33 = arith.constant 0 : index
      %c0_34 = arith.constant 0 : index
      %87 = vector.load %arg3[%c0_33, %c0_34] : memref<32x96xbf16, #tpu.memory_space<vmem>>, vector<32x96xbf16>
      %cst_35 = arith.constant dense<0.000000e+00> : vector<16x96xf32>
      %88 = tpu.matmul %86, %87, %cst_35 {dimension_numbers = #tpu.dot_dimension_numbers<[1], [0], [0], [1], [0, 0, 1, 1], [], []>} : vector<16x32xbf16>, vector<32x96xbf16>, vector<16x96xf32> -> vector<16x96xf32>
      %c0_36 = arith.constant 0 : index
      %c0_37 = arith.constant 0 : index
      %89 = vector.load %arg4[%c0_36, %c0_37] : memref<1x96xf32, #tpu.memory_space<vmem>>, vector<1x96xf32>
      %90 = vector.broadcast %89 : vector<1x96xf32> to vector<16x96xf32>
      %91 = arith.addf %88, %90 : vector<16x96xf32>
      %92 = arith.truncf %91 : vector<16x96xf32> to vector<16x96xbf16>
      %c0_38 = arith.constant 0 : index
      %c0_39 = arith.constant 0 : index
      %93 = vector.load %arg8[%c0_38, %c0_39] : memref<16x96xbf16, #tpu.memory_space<vmem>>, vector<16x96xbf16>
      tpu.vector_store %arg8[%c0_38, %c0_39], %92 {strides = array<i32>} : memref<16x96xbf16, #tpu.memory_space<vmem>>, vector<16x96xbf16>,
    } else {
    }
    %c16_i32 = arith.constant 16 : i32
    %3 = arith.muli %arg1, %c16_i32 : i32
    %4 = tpu.assume_multiple %3, 16 : i32
    %5 = arith.index_cast %4 : i32 to index
    %c0 = arith.constant 0 : index
    %6 = vector.load %arg8[%5, %c0] : memref<16x96xbf16, #tpu.memory_space<vmem>>, vector<16x32xbf16>
    %c0_1 = arith.constant 0 : index
    %c32 = arith.constant 32 : index
    %7 = vector.load %arg8[%c0_1, %c32] : memref<16x96xbf16, #tpu.memory_space<vmem>>, vector<16x32xbf16>
    %c0_2 = arith.constant 0 : index
    %c64 = arith.constant 64 : index
    %8 = vector.load %arg8[%c0_2, %c64] : memref<16x96xbf16, #tpu.memory_space<vmem>>, vector<16x32xbf16>
    %9 = vector.extract_strided_slice %6 {offsets = [0, 0], sizes = [16, 8], strides = [1, 1]} : vector<16x32xbf16> to vector<16x8xbf16>
    %10 = vector.extract_strided_slice %7 {offsets = [0, 0], sizes = [16, 8], strides = [1, 1]} : vector<16x32xbf16> to vector<16x8xbf16>
    %11 = vector.extract_strided_slice %8 {offsets = [0, 0], sizes = [16, 8], strides = [1, 1]} : vector<16x32xbf16> to vector<16x8xbf16>
    %cst = arith.constant dense<0.000000e+00> : vector<16x16xf32>
    %12 = tpu.matmul %9, %10, %cst {dimension_numbers = #tpu.dot_dimension_numbers<[1], [1], [0], [0], [0, 0, 1, 0], [], []>} : vector<16x8xbf16>, vector<16x8xbf16>, vector<16x16xf32> -> vector<16x16xf32>
    %cst_3 = arith.constant dense<0xFF800000> : vector<16xf32>
    %13 = vector.multi_reduction <maximumf>, %12, %cst_3 [1] : vector<16x16xf32> to vector<16xf32>
    %14 = vector.shape_cast %13 : vector<16xf32> to vector<16x1xf32>
    %15 = vector.broadcast %14 : vector<16x1xf32> to vector<16x16xf32>
    %16 = arith.subf %12, %15 : vector<16x16xf32>
    %17 = math.exp %16 : vector<16x16xf32>
    %cst_4 = arith.constant dense<0.000000e+00> : vector<16xf32>
    %18 = vector.multi_reduction <add>, %17, %cst_4 [1] : vector<16x16xf32> to vector<16xf32>
    %19 = vector.shape_cast %18 : vector<16xf32> to vector<16x1xf32>
    %20 = tpu.reciprocal %19 {approx = true} : vector<16x1xf32> -> vector<16x1xf32>
    %21 = vector.broadcast %20 : vector<16x1xf32> to vector<16x16xf32>
    %22 = arith.mulf %17, %21 : vector<16x16xf32>
    %23 = arith.truncf %22 : vector<16x16xf32> to vector<16x16xbf16>
    %cst_5 = arith.constant dense<0.000000e+00> : vector<16x8xf32>
    %24 = tpu.matmul %23, %11, %cst_5 {dimension_numbers = #tpu.dot_dimension_numbers<[1], [0], [0], [1], [0, 0, 1, 1], [], []>} : vector<16x16xbf16>, vector<16x8xbf16>, vector<16x8xf32> -> vector<16x8xf32>
    %25 = vector.extract_strided_slice %6 {offsets = [0, 8], sizes = [16, 8], strides = [1, 1]} : vector<16x32xbf16> to vector<16x8xbf16>
    %26 = vector.extract_strided_slice %7 {offsets = [0, 8], sizes = [16, 8], strides = [1, 1]} : vector<16x32xbf16> to vector<16x8xbf16>
    %27 = vector.extract_strided_slice %8 {offsets = [0, 8], sizes = [16, 8], strides = [1, 1]} : vector<16x32xbf16> to vector<16x8xbf16>
    %cst_6 = arith.constant dense<0.000000e+00> : vector<16x16xf32>
    %28 = tpu.matmul %25, %26, %cst_6 {dimension_numbers = #tpu.dot_dimension_numbers<[1], [1], [0], [0], [0, 0, 1, 0], [], []>} : vector<16x8xbf16>, vector<16x8xbf16>, vector<16x16xf32> -> vector<16x16xf32>
    %cst_7 = arith.constant dense<0xFF800000> : vector<16xf32>
    %29 = vector.multi_reduction <maximumf>, %28, %cst_7 [1] : vector<16x16xf32> to vector<16xf32>
    %30 = vector.shape_cast %29 : vector<16xf32> to vector<16x1xf32>
    %31 = vector.broadcast %30 : vector<16x1xf32> to vector<16x16xf32>
    %32 = arith.subf %28, %31 : vector<16x16xf32>
    %33 = math.exp %32 : vector<16x16xf32>
    %cst_8 = arith.constant dense<0.000000e+00> : vector<16xf32>
    %34 = vector.multi_reduction <add>, %33, %cst_8 [1] : vector<16x16xf32> to vector<16xf32>
    %35 = vector.shape_cast %34 : vector<16xf32> to vector<16x1xf32>
    %36 = tpu.reciprocal %35 {approx = true} : vector<16x1xf32> -> vector<16x1xf32>
    %37 = vector.broadcast %36 : vector<16x1xf32> to vector<16x16xf32>
    %38 = arith.mulf %33, %37 : vector<16x16xf32>
    %39 = arith.truncf %38 : vector<16x16xf32> to vector<16x16xbf16>
    %cst_9 = arith.constant dense<0.000000e+00> : vector<16x8xf32>
    %40 = tpu.matmul %39, %27, %cst_9 {dimension_numbers = #tpu.dot_dimension_numbers<[1], [0], [0], [1], [0, 0, 1, 1], [], []>} : vector<16x16xbf16>, vector<16x8xbf16>, vector<16x8xf32> -> vector<16x8xf32>
    %41 = vector.extract_strided_slice %6 {offsets = [0, 16], sizes = [16, 8], strides = [1, 1]} : vector<16x32xbf16> to vector<16x8xbf16>
    %42 = vector.extract_strided_slice %7 {offsets = [0, 16], sizes = [16, 8], strides = [1, 1]} : vector<16x32xbf16> to vector<16x8xbf16>
    %43 = vector.extract_strided_slice %8 {offsets = [0, 16], sizes = [16, 8], strides = [1, 1]} : vector<16x32xbf16> to vector<16x8xbf16>
    %cst_10 = arith.constant dense<0.000000e+00> : vector<16x16xf32>
    %44 = tpu.matmul %41, %42, %cst_10 {dimension_numbers = #tpu.dot_dimension_numbers<[1], [1], [0], [0], [0, 0, 1, 0], [], []>} : vector<16x8xbf16>, vector<16x8xbf16>, vector<16x16xf32> -> vector<16x16xf32>
    %cst_11 = arith.constant dense<0xFF800000> : vector<16xf32>
    %45 = vector.multi_reduction <maximumf>, %44, %cst_11 [1] : vector<16x16xf32> to vector<16xf32>
    %46 = vector.shape_cast %45 : vector<16xf32> to vector<16x1xf32>
    %47 = vector.broadcast %46 : vector<16x1xf32> to vector<16x16xf32>
    %48 = arith.subf %44, %47 : vector<16x16xf32>
    %49 = math.exp %48 : vector<16x16xf32>
    %cst_12 = arith.constant dense<0.000000e+00> : vector<16xf32>
    %50 = vector.multi_reduction <add>, %49, %cst_12 [1] : vector<16x16xf32> to vector<16xf32>
    %51 = vector.shape_cast %50 : vector<16xf32> to vector<16x1xf32>
    %52 = tpu.reciprocal %51 {approx = true} : vector<16x1xf32> -> vector<16x1xf32>
    %53 = vector.broadcast %52 : vector<16x1xf32> to vector<16x16xf32>
    %54 = arith.mulf %49, %53 : vector<16x16xf32>
    %55 = arith.truncf %54 : vector<16x16xf32> to vector<16x16xbf16>
    %cst_13 = arith.constant dense<0.000000e+00> : vector<16x8xf32>
    %56 = tpu.matmul %55, %43, %cst_13 {dimension_numbers = #tpu.dot_dimension_numbers<[1], [0], [0], [1], [0, 0, 1, 1], [], []>} : vector<16x16xbf16>, vector<16x8xbf16>, vector<16x8xf32> -> vector<16x8xf32>
    %57 = vector.extract_strided_slice %6 {offsets = [0, 24], sizes = [16, 8], strides = [1, 1]} : vector<16x32xbf16> to vector<16x8xbf16>
    %58 = vector.extract_strided_slice %7 {offsets = [0, 24], sizes = [16, 8], strides = [1, 1]} : vector<16x32xbf16> to vector<16x8xbf16>
    %59 = vector.extract_strided_slice %8 {offsets = [0, 24], sizes = [16, 8], strides = [1, 1]} : vector<16x32xbf16> to vector<16x8xbf16>
    %cst_14 = arith.constant dense<0.000000e+00> : vector<16x16xf32>
    %60 = tpu.matmul %57, %58, %cst_14 {dimension_numbers = #tpu.dot_dimension_numbers<[1], [1], [0], [0], [0, 0, 1, 0], [], []>} : vector<16x8xbf16>, vector<16x8xbf16>, vector<16x16xf32> -> vector<16x16xf32>
    %cst_15 = arith.constant dense<0xFF800000> : vector<16xf32>
    %61 = vector.multi_reduction <maximumf>, %60, %cst_15 [1] : vector<16x16xf32> to vector<16xf32>
    %62 = vector.shape_cast %61 : vector<16xf32> to vector<16x1xf32>
    %63 = vector.broadcast %62 : vector<16x1xf32> to vector<16x16xf32>
    %64 = arith.subf %60, %63 : vector<16x16xf32>
    %65 = math.exp %64 : vector<16x16xf32>
    %cst_16 = arith.constant dense<0.000000e+00> : vector<16xf32>
    %66 = vector.multi_reduction <add>, %65, %cst_16 [1] : vector<16x16xf32> to vector<16xf32>
    %67 = vector.shape_cast %66 : vector<16xf32> to vector<16x1xf32>
    %68 = tpu.reciprocal %67 {approx = true} : vector<16x1xf32> -> vector<16x1xf32>
    %69 = vector.broadcast %68 : vector<16x1xf32> to vector<16x16xf32>
    %70 = arith.mulf %65, %69 : vector<16x16xf32>
    %71 = arith.truncf %70 : vector<16x16xf32> to vector<16x16xbf16>
    %cst_17 = arith.constant dense<0.000000e+00> : vector<16x8xf32>
    %72 = tpu.matmul %71, %59, %cst_17 {dimension_numbers = #tpu.dot_dimension_numbers<[1], [0], [0], [1], [0, 0, 1, 1], [], []>} : vector<16x16xbf16>, vector<16x8xbf16>, vector<16x8xf32> -> vector<16x8xf32>
    %73 = tpu.concatenate %24, %40, %56, %72 in 1 : vector<16x8xf32>, vector<16x8xf32>, vector<16x8xf32>, vector<16x8xf32> -> vector<16x32xf32>
    %c0_18 = arith.constant 0 : index
    %c0_19 = arith.constant 0 : index
    %74 = vector.load %arg9[%c0_18, %c0_19] : memref<16x32xf32, #tpu.memory_space<vmem>>, vector<16x32xf32>
    tpu.vector_store %arg9[%c0_18, %c0_19], %73 {strides = array<i32>} : memref<16x32xf32, #tpu.memory_space<vmem>>, vector<16x32xf32>,
    %c0_20 = arith.constant 0 : index
    %c0_21 = arith.constant 0 : index
    %75 = vector.load %arg9[%c0_20, %c0_21] : memref<16x32xf32, #tpu.memory_space<vmem>>, vector<16x32xf32>
    %76 = arith.truncf %75 : vector<16x32xf32> to vector<16x32xbf16>
    %c0_22 = arith.constant 0 : index
    %c0_23 = arith.constant 0 : index
    %77 = vector.load %arg5[%c0_22, %c0_23] : memref<32x32xbf16, #tpu.memory_space<vmem>>, vector<32x32xbf16>
    %cst_24 = arith.constant dense<0.000000e+00> : vector<16x32xf32>
    %78 = tpu.matmul %76, %77, %cst_24 {dimension_numbers = #tpu.dot_dimension_numbers<[1], [0], [0], [1], [0, 0, 1, 1], [], []>} : vector<16x32xbf16>, vector<32x32xbf16>, vector<16x32xf32> -> vector<16x32xf32>
    %c0_25 = arith.constant 0 : index
    %c0_26 = arith.constant 0 : index
    %79 = vector.load %arg6[%c0_25, %c0_26] : memref<1x32xf32, #tpu.memory_space<vmem>>, vector<1x32xf32>
    %80 = vector.broadcast %79 : vector<1x32xf32> to vector<16x32xf32>
    %81 = arith.addf %78, %80 : vector<16x32xf32>
    %c0_27 = arith.constant 0 : index
    %c0_28 = arith.constant 0 : index
    %c0_29 = arith.constant 0 : index
    %82 = vector.load %arg7[%c0_27, %c0_28, %c0_29] : memref<1x16x32xf32, #tpu.memory_space<vmem>>, vector<1x16x32xf32>
    %83 = vector.shape_cast %82 : vector<1x16x32xf32> to vector<16x32xf32>
    %84 = vector.shape_cast %81 : vector<16x32xf32> to vector<1x16x32xf32>
    tpu.vector_store %arg7[%c0_27, %c0_28, %c0_29], %84 {strides = array<i32>} : memref<1x16x32xf32, #tpu.memory_space<vmem>>, vector<1x16x32xf32>,
    return
  }
  func.func @transform_0(%arg0: i32, %arg1: i32) -> (i32, i32, i32) {
    %c0_i32 = arith.constant 0 : i32
    %c0_i32_0 = arith.constant 0 : i32
    %c0_i32_1 = arith.constant 0 : i32
    return %arg0, %c0_i32, %c0_i32_0 : i32, i32, i32
  }
  func.func @transform_1(%arg0: i32, %arg1: i32) -> (i32, i32) {
    %c0_i32 = arith.constant 0 : i32
    %c0_i32_0 = arith.constant 0 : i32
    %c0_i32_1 = arith.constant 0 : i32
    return %c0_i32, %c0_i32_0 : i32, i32
  }
  func.func @transform_2(%arg0: i32, %arg1: i32) -> (i32, i32) {
    %c0_i32 = arith.constant 0 : i32
    %c0_i32_0 = arith.constant 0 : i32
    %c0_i32_1 = arith.constant 0 : i32
    return %c0_i32, %c0_i32_0 : i32, i32
  }
  func.func @transform_3(%arg0: i32, %arg1: i32) -> (i32, i32) {
    %c0_i32 = arith.constant 0 : i32
    %c0_i32_0 = arith.constant 0 : i32
    %c0_i32_1 = arith.constant 0 : i32
    return %c0_i32, %c0_i32_0 : i32, i32
  }
  func.func @transform_4(%arg0: i32, %arg1: i32) -> (i32, i32) {
    %c0_i32 = arith.constant 0 : i32
    %c0_i32_0 = arith.constant 0 : i32
    %c0_i32_1 = arith.constant 0 : i32
    return %c0_i32, %c0_i32_0 : i32, i32
  }
  func.func @transform_5(%arg0: i32, %arg1: i32) -> (i32, i32, i32) {
    %c0_i32 = arith.constant 0 : i32
    %c0_i32_0 = arith.constant 0 : i32
    return %arg0, %arg1, %c0_i32 : i32, i32, i32
  }
}

</mosaic_0001>

<llo_original>
// kernel: vit_attention.1
$region0: #{vit_attention.1}
  #allocation0 [shape = 'u32[]', space=smem, size = 0x4, offset = 0x4, fixed_abs, tag = 'smem constant byte address 0x4 - core index']
  #allocation1 [shape = 'u32[144,128]{1,0:T(1,128)}', space=vmem, size = 0x12000, scoped, tag = 'internal scratch']
  #allocation2 [shape = 'bf16[16,96]{1,0:T(8,128)(2,1)}', space=vmem, size = 0x1000, scoped, tag = 'scratch operand']
  #allocation3 [shape = 'f32[16,32]{1,0:T(8,128)}', space=vmem, size = 0x2000, scoped, tag = 'scratch operand']
  %s0 = inlined_call_operand.vmem [shape: bf16[2,16,32], index: 0, kind: input, shape index: {}]
  %s1 = inlined_call_operand.vmem [shape: bf16[32,96], index: 1, kind: input, shape index: {}]
  %s2 = inlined_call_operand.vmem [shape: f32[1,96], index: 2, kind: input, shape index: {}]
  %s3 = inlined_call_operand.vmem [shape: bf16[32,32], index: 3, kind: input, shape index: {}]
  %s4 = inlined_call_operand.vmem [shape: f32[1,32], index: 4, kind: input, shape index: {}]
  %s5 = inlined_call_operand.hbm [shape: f32[2,16,32], index: 5, kind: output, shape index: {}]
  %s6 = sld [smem:[#allocation0]]
  $region57: #{vit_attention.1} parent=0
    _
  %s8 = ssub.s32 1, %s6
  %s9 = scalar_select 0, %s8, %s6
  $region1: #{vit_attention.1} parent=0
    #allocation4 [shape = 'u8[16384]{0}', space=vmem, size = 0x4000, scoped, tag = 'output window, operand 0']
    #allocation5 [shape = 's32[2]{0}', space=sflag, size = 0x8, scoped, tag = 'scoped memory for vit_attention.1']
    %10 = vsyncpa [#allocation5], 0
    %s11 = scalar_lea.sflag [#allocation5], 1
    %12 = vsyncpa %s11, 0
    loop: start=0, step=1, limit=4
    $region2: #{vit_attention.1} parent=1 // loop_pre_header
      _
    $region3: #{vit_attention.1} parent=1 // loop_header
      %s14 = sphi 0, %s18
      %p15 = scmp.ge.s32.totalorder %s14, 4
      %s21 = sphi 0, %s33
      %s22 = sphi 0, %s29
      %s23 = sphi 0, %s21
      %s24 = sphi 0, %s22
      %s25 = sphi 0, %s23
      %s26 = sphi 0, %s24
      %s36 = sphi 0, %s38
      %s39 = sphi 0, %s36
      %s40 = sphi 0, %s39
      %s56 = sphi 0, %s40
      %s60 = sphi 0, %s60
      %s62 = sphi 0, %s60
      %s63 = sphi 0, %s62
      %s77 = sphi 0, %s63
      %s81 = sphi 0, %s81
      %s83 = sphi 0, %s81
      %s84 = sphi 0, %s83
      %s98 = sphi 0, %s84
      %s102 = sphi 0, %s102
      %s104 = sphi 0, %s102
      %s105 = sphi 0, %s104
      %s119 = sphi 0, %s105
      %s123 = sphi 0, %s123
      %s125 = sphi 0, %s123
      %s126 = sphi 0, %s125
      %s140 = sphi 0, %s126
      %s148 = sphi 0, %s150
      %s151 = sphi 0, %s148
      %s152 = sphi 0, %s151
      %s168 = sphi 0, %s152
    $region4: #{vit_attention.1} parent=1 // loop_header_branch
      %17 = sbr.rel (%p15) target = $region8
    $region5: #{vit_attention.1} parent=1 // loop_body
      %s19 = ssub.s32 %s14, 1
      %s20 = ssub.s32 %s14, 2
      %s27 = sadd.s32 1, %s22
      %p28 = scmp.ge.s32.totalorder %s27, 1
      %s29 = scalar_select %p28, 0, %s27
      %s30 = sadd.s32 1, %s21
      %s31 = scalar_select %p28, %s30, %s21
      %p32 = scmp.ge.s32.totalorder %s31, 2
      %s33 = scalar_select %p32, 0, %s31
      %s34 = ssub.s32 %s21, %s33
      %p35 = scmp.eq.s32.totalorder %s34, 0
      %s37 = sadd.s32 %s36, 1
      %s38 = scalar_select %p35, %s36, %s37
      %p41 = pneg %p35
      %p42 = scmp.eq.s32.totalorder %s14, 1
      %p43 = por %p41, %p42
      %p44 = scmp.ne.s32.totalorder %s36, %s39
      %p45 = scmp.eq.s32.totalorder %s14, 0
      %p46 = por %p44, %p45
      %p47 = scmp.ne.s32.totalorder %s36, %s39
      %p48 = scmp.eq.s32.totalorder %s19, 1
      %p49 = por %p47, %p48
      %p50 = scmp.ne.s32.totalorder %s39, %s40
      %p51 = scmp.eq.s32.totalorder %s19, 0
      %p52 = por %p50, %p51
      %p53 = scmp.ne.s32.totalorder %s39, %s40
      %p54 = scmp.eq.s32.totalorder %s20, 1
      %p55 = por %p53, %p54
      %p57 = scmp.ne.s32.totalorder %s40, %s56
      %p58 = scmp.eq.s32.totalorder %s20, 0
      %p59 = por %p57, %p58
      %s61 = sadd.s32 %s60, 1
      %p64 = scmp.eq.s32.totalorder %s14, 1
      %p65 = scmp.ne.s32.totalorder %s60, %s62
      %p66 = scmp.eq.s32.totalorder %s14, 0
      %p67 = por %p65, %p66
      %p68 = scmp.ne.s32.totalorder %s60, %s62
      %p69 = scmp.eq.s32.totalorder %s19, 1
      %p70 = por %p68, %p69
      %p71 = scmp.ne.s32.totalorder %s62, %s63
      %p72 = scmp.eq.s32.totalorder %s19, 0
      %p73 = por %p71, %p72
      %p74 = scmp.ne.s32.totalorder %s62, %s63
      %p75 = scmp.eq.s32.totalorder %s20, 1
      %p76 = por %p74, %p75
      %p78 = scmp.ne.s32.totalorder %s63, %s77
      %p79 = scmp.eq.s32.totalorder %s20, 0
      %p80 = por %p78, %p79
      %s82 = sadd.s32 %s81, 1
      %p85 = scmp.eq.s32.totalorder %s14, 1
      %p86 = scmp.ne.s32.totalorder %s81, %s83
      %p87 = scmp.eq.s32.totalorder %s14, 0
      %p88 = por %p86, %p87
      %p89 = scmp.ne.s32.totalorder %s81, %s83
      %p90 = scmp.eq.s32.totalorder %s19, 1
      %p91 = por %p89, %p90
      %p92 = scmp.ne.s32.totalorder %s83, %s84
      %p93 = scmp.eq.s32.totalorder %s19, 0
      %p94 = por %p92, %p93
      %p95 = scmp.ne.s32.totalorder %s83, %s84
      %p96 = scmp.eq.s32.totalorder %s20, 1
      %p97 = por %p95, %p96
      %p99 = scmp.ne.s32.totalorder %s84, %s98
      %p100 = scmp.eq.s32.totalorder %s20, 0
      %p101 = por %p99, %p100
      %s103 = sadd.s32 %s102, 1
      %p106 = scmp.eq.s32.totalorder %s14, 1
      %p107 = scmp.ne.s32.totalorder %s102, %s104
      %p108 = scmp.eq.s32.totalorder %s14, 0
      %p109 = por %p107, %p108
      %p110 = scmp.ne.s32.totalorder %s102, %s104
      %p111 = scmp.eq.s32.totalorder %s19, 1
      %p112 = por %p110, %p111
      %p113 = scmp.ne.s32.totalorder %s104, %s105
      %p114 = scmp.eq.s32.totalorder %s19, 0
      %p115 = por %p113, %p114
      %p116 = scmp.ne.s32.totalorder %s104, %s105
      %p117 = scmp.eq.s32.totalorder %s20, 1
      %p118 = por %p116, %p117
      %p120 = scmp.ne.s32.totalorder %s105, %s119
      %p121 = scmp.eq.s32.totalorder %s20, 0
      %p122 = por %p120, %p121
      %s124 = sadd.s32 %s123, 1
      %p127 = scmp.eq.s32.totalorder %s14, 1
      %p128 = scmp.ne.s32.totalorder %s123, %s125
      %p129 = scmp.eq.s32.totalorder %s14, 0
      %p130 = por %p128, %p129
      %p131 = scmp.ne.s32.totalorder %s123, %s125
      %p132 = scmp.eq.s32.totalorder %s19, 1
      %p133 = por %p131, %p132
      %p134 = scmp.ne.s32.totalorder %s125, %s126
      %p135 = scmp.eq.s32.totalorder %s19, 0
      %p136 = por %p134, %p135
      %p137 = scmp.ne.s32.totalorder %s125, %s126
      %p138 = scmp.eq.s32.totalorder %s20, 1
      %p139 = por %p137, %p138
      %p141 = scmp.ne.s32.totalorder %s126, %s140
      %p142 = scmp.eq.s32.totalorder %s20, 0
      %p143 = por %p141, %p142
      %s144 = ssub.s32 %s21, %s33
      %s145 = ssub.s32 %s22, %s29
      %s146 = sor.u32 %s144, %s145
      %p147 = scmp.eq.s32.totalorder %s146, 0
      %s149 = sadd.s32 %s148, 1
      %s150 = scalar_select %p147, %s148, %s149
      %p153 = pneg %p147
      %p154 = scmp.eq.s32.totalorder %s14, 1
      %p155 = por %p153, %p154
      %p156 = scmp.ne.s32.totalorder %s148, %s151
      %p157 = scmp.eq.s32.totalorder %s14, 0
      %p158 = por %p156, %p157
      %p159 = scmp.ne.s32.totalorder %s148, %s151
      %p160 = scmp.eq.s32.totalorder %s19, 1
      %p161 = por %p159, %p160
      %p162 = scmp.ne.s32.totalorder %s151, %s152
      %p163 = scmp.eq.s32.totalorder %s19, 0
      %p164 = por %p162, %p163
      %p165 = scmp.ne.s32.totalorder %s151, %s152
      %p166 = scmp.eq.s32.totalorder %s20, 1
      %p167 = por %p165, %p166
      %p169 = scmp.ne.s32.totalorder %s152, %s168
      %p170 = scmp.eq.s32.totalorder %s20, 0
      %p171 = por %p169, %p170
      %p172 = scmp.le.s32.totalorder 1, %s14
      %p173 = scmp.lt.s32.totalorder %s14, 3
      %p174 = pnand %p172, %p173
      %p175 = pneg %p174
      // Predicated region
      $region9: #{vit_attention.1} parent=5 // pred_check
        _
      $region10: #{vit_attention.1} parent=5 // pred_check_branch
        %177 = sbr.rel (%p174) target = $region12
      $region11: #{vit_attention.1} parent=5 // pred_region
        %s178 = ssub.s32 %s14, 1
        // Predicated region
        $region13: #{vit_attention.1} parent=11 // pred_check
          %p179 = pneg %p73
        $region14: #{vit_attention.1} parent=11 // pred_check_branch
          %181 = sbr.rel (%p179) target = $region16
        $region15: #{vit_attention.1} parent=11 // pred_region
          _
        $region16: #{vit_attention.1} parent=11 // pred_fallthru
          _
        // Predicated region
        $region17: #{vit_attention.1} parent=11 // pred_check
          %p182 = pneg %p94
        $region18: #{vit_attention.1} parent=11 // pred_check_branch
          %184 = sbr.rel (%p182) target = $region20
        $region19: #{vit_attention.1} parent=11 // pred_region
          _
        $region20: #{vit_attention.1} parent=11 // pred_fallthru
          _
        // Predicated region
        $region21: #{vit_attention.1} parent=11 // pred_check
          %p185 = pneg %p115
        $region22: #{vit_attention.1} parent=11 // pred_check_branch
          %187 = sbr.rel (%p185) target = $region24
        $region23: #{vit_attention.1} parent=11 // pred_region
          _
        $region24: #{vit_attention.1} parent=11 // pred_fallthru
          _
        // Predicated region
        $region25: #{vit_attention.1} parent=11 // pred_check
          %p188 = pneg %p136
        $region26: #{vit_attention.1} parent=11 // pred_check_branch
          %190 = sbr.rel (%p188) target = $region28
        $region27: #{vit_attention.1} parent=11 // pred_region
          _
        $region28: #{vit_attention.1} parent=11 // pred_fallthru
          _
      $region12: #{vit_attention.1} parent=5 // pred_fallthru
        _
      %p191 = scmp.lt.s32.totalorder %s14, 2
      // Predicated region
      $region29: #{vit_attention.1} parent=5 // pred_check
        %p192 = pneg %p191
      $region30: #{vit_attention.1} parent=5 // pred_check_branch
        %194 = sbr.rel (%p192) target = $region32
      $region31: #{vit_attention.1} parent=5 // pred_region
        // Predicated region
        $region33: #{vit_attention.1} parent=31 // pred_check
          %p195 = pneg %p46
        $region34: #{vit_attention.1} parent=31 // pred_check_branch
          %197 = sbr.rel (%p195) target = $region36
        $region35: #{vit_attention.1} parent=31 // pred_region
          %p198 = scmp.lt.s32.totalorder %s21, 1
          %s199 = scalar_select %p198, %s21, 1
          %s200 = smul.addr %s199, 2
          %s201 = smul.addr %s200, 4
          %s202 = scalar_lea.vmem %s0, %s201
        $region36: #{vit_attention.1} parent=31 // pred_fallthru
          _
      $region32: #{vit_attention.1} parent=5 // pred_fallthru
        _
      %p203 = scmp.le.s32.totalorder 1, %s14
      %p204 = scmp.lt.s32.totalorder %s14, 3
      %p205 = pnand %p203, %p204
      %p206 = pneg %p205
      // Predicated region
      $region37: #{vit_attention.1} parent=5 // pred_check
        _
      $region38: #{vit_attention.1} parent=5 // pred_check_branch
        %208 = sbr.rel (%p205) target = $region40
      $region39: #{vit_attention.1} parent=5 // pred_region
        %s209 = ssub.s32 %s14, 1
        %p210 = scmp.lt.s32.totalorder %s23, 1
        %s211 = scalar_select %p210, %s23, 1
        %s212 = smul.addr %s211, 2
        %s213 = smul.addr %s212, 4
        %s214 = scalar_lea.vmem %s0, %s213
        %p215 = pneg %p52
        %p216 = pneg %p49
        %p217 = pneg %p73
        %p218 = pneg %p70
        %p219 = pneg %p94
        %p220 = pneg %p91
        %p221 = pneg %p115
        %p222 = pneg %p112
        %p223 = pneg %p136
        %p224 = pneg %p133
        %p225 = pneg %p164
        %p226 = pneg %p161
        %s227 = sand.u32 %s151, 1
        %s228 = scalar_lea.sflag [#allocation5], %s227
        %s229 = sand.u32 %s151, 1
        %s230 = smul.addr %s229, 16
        %s231 = scalar_lea.vmem [#allocation4], %s230
        %p232 = scmp.lt.s32.totalorder %s23, 1
        %s233 = scalar_select %p232, %s23, 1
        %s234 = smul.addr %s233, 2
        %s235 = smul.addr %s234, 4
        %s236 = scalar_lea.vmem %s0, %s235
        %s237 = smul.u32 2, %s24
        %p239 = scmp.eq.s32.totalorder %s24, 0
        // Predicated region
        $region41: #{vit_attention.1} parent=39 // pred_check
          %p240 = pneg %p239
        $region42: #{vit_attention.1} parent=39 // pred_check_branch
          %242 = sbr.rel (%p240) target = $region44
        $region43: #{vit_attention.1} parent=39 // pred_region
          %v243 = vld [vmem:[%s236] sm:$0xf]
          %v244 = vld [vmem:[%s236 + $0x4] sm:$0xf]
          %v245 = vld [vmem:[%s1] sm:$0xf]
          %v246 = vld [vmem:[%s1 + $0x4] sm:$0xf]
          %v247 = vld [vmem:[%s1 + $0x8] sm:$0xf]
          %v248 = vld [vmem:[%s1 + $0xc] sm:$0xf]
          %v249 = vld [vmem:[%s2] sm:$0x1]
          %v251 = vlaneseq
          %v252 = vshrl.u32 %v251, 7
          %v253 = vsub.s32 0, %v252
          %v254 = vrot.slane %v249, %v253
          %v258 = vunpack.c.l.b16 %v243
          %v259 = vunpack.c.l.b16 %v244
          %v260 = vpack.c.b16 %v259, %v258
          %v265 = vunpack.c.l.b16 %v245
          %v266 = vunpack.c.l.b16 %v246
          %v267 = vunpack.c.l.b16 %v247
          %v268 = vunpack.c.l.b16 %v248
          %v269 = vpack.c.b16 %v266, %v265
          %v270 = vpack.c.b16 %v268, %v267
          %vm273 = vcmask 261120
          %v275 = vsel %vm273, %v260, 0
          %277 = vmatprep.subr.bf16.mxu0 0
          %278 = vmatpush1.bf16.msra.mxu0 0
          %279 = vmatprep.subr.bf16.mxu0 0
          %280 = vmatpush1.bf16.msra.mxu0 0
          %281 = vmatprep.subr.bf16.mxu0 0
          %282 = vmatpush1.bf16.msra.mxu0 0
          %283 = vmatprep.subr.bf16.mxu0 0
          %284 = vmatpush1.bf16.msra.mxu0 0
          %285 = vmatprep.subr.bf16.mxu0 0
          %286 = vmatpush1.bf16.msra.mxu0 0
          %287 = vmatprep.subr.bf16.mxu0 0
          %288 = vmatpush1.bf16.msra.mxu0 0
          %289 = vmatprep.subr.bf16.mxu0 0
          %290 = vmatpush1.bf16.msra.mxu0 %v270
          %291 = vmatprep.subr.bf16.mxu0 0
          %292 = vmatpush1.bf16.msra.mxu0 %v269
          %293 = vmatprep.subr.bf16.mxu0 0
          %294 = vmatpush2.bf16.msra.mxu0 0
          %295 = vmatprep.subr.bf16.mxu0 0
          %296 = vmatpush2.bf16.msra.mxu0 0
          %297 = vmatprep.subr.bf16.mxu0 0
          %298 = vmatpush2.bf16.msra.mxu0 0
          %299 = vmatprep.subr.bf16.mxu0 0
          %300 = vmatpush2.bf16.msra.mxu0 0
          %301 = vmatprep.subr.bf16.mxu0 0
          %302 = vmatpush2.bf16.msra.mxu0 0
          %303 = vmatprep.subr.bf16.mxu0 0
          %304 = vmatpush2.bf16.msra.mxu0 0
          %305 = vmatprep.subr.bf16.mxu0 0
          %306 = vmatpush2.bf16.msra.mxu0 0
          %307 = vmatprep.subr.bf16.mxu0 0
          %308 = vmatpush2.bf16.msra.mxu0 0
          %309 = vmatprep.mubr.bf16.mxu0 0
          %310 = vmatmul.mubr.bf16.gmra.mxu0 %v275
          %v311 = vpop.f32.mrf.mxu0
          %v312 = vadd.f32 %v254, %v311
          %v313 = vpop.f32.mrf.mxu0
          %v314 = vpop.f32.mrf.mxu0
          %v315 = vadd.f32 %v254, %v314
          %v316 = vpop.f32.mrf.mxu0
          %317 = vdwg.mxu0
          %v318 = vpack.c.bf16 %v315, %v312
          %v320 = vunpack.c.l.b16 %v318
          %v321 = vunpack.c.h.b16 %v318
          %v322 = vpack.c.b16 %v320, %v320
          %v323 = vpack.c.b16 %v321, %v321
          %vm326 = vcmask 781312
          %327 = vst.msk [vmem:[#allocation2] sm:$0xf] %vm326, %v322
          %328 = vst.msk [vmem:[#allocation2 + $0x4] sm:$0xf] %vm326, %v323
        $region44: #{vit_attention.1} parent=39 // pred_fallthru
          _
        %s329 = smul.u32 %s24, 16
        %s330 = sshra.s32 %s329, 3
        %s331 = sand.u32 %s329, 7
        %s332 = smul.addr %s330, 4
        %s333 = scalar_lea.vmem [#allocation2], %s332
        %v334 = vld [vmem:[%s333] sm:$0xf]
        %v335 = vld [vmem:[%s333 + $0x4] sm:$0xf]
        %v336 = vld [vmem:[#allocation2] sm:$0xf]
        %v337 = vld [vmem:[#allocation2 + $0x4] sm:$0xf]
        %v340 = vunpack.c.l.b16 %v334
        %v341 = vunpack.c.l.b16 %v335
        %v342 = vpack.c.b16 %v341, %v340
        %v345 = vunpack.c.l.b16 %v336
        %v346 = vunpack.c.l.b16 %v337
        %v347 = vpack.c.b16 %v346, %v345
        %348 = vrot.lane.b32.xlu0 %v347, 96
        %v349 = vpop.permute.xlu0 %348
        %vm350 = vcmask 64512
        %v352 = vsel %vm350, %v342, 0
        %v355 = vsel %vm350, %v349, 0
        %357 = vmatprep.subr.bf16.mxu0 0
        %358 = vmatpush1.bf16.xpose.msra.mxu0 0
        %359 = vmatprep.subr.bf16.mxu0 0
        %360 = vmatpush1.bf16.xpose.msra.mxu0 0
        %361 = vmatprep.subr.bf16.mxu0 0
        %362 = vmatpush1.bf16.xpose.msra.mxu0 0
        %363 = vmatprep.subr.bf16.mxu0 0
        %364 = vmatpush1.bf16.xpose.msra.mxu0 0
        %365 = vmatprep.subr.bf16.mxu0 0
        %366 = vmatpush1.bf16.xpose.msra.mxu0 0
        %367 = vmatprep.subr.bf16.mxu0 0
        %368 = vmatpush1.bf16.xpose.msra.mxu0 0
        %369 = vmatprep.subr.bf16.mxu0 0
        %370 = vmatpush1.bf16.xpose.msra.mxu0 0
        %371 = vmatprep.subr.bf16.mxu0 0
        %372 = vmatpush1.bf16.xpose.msra.mxu0 %v355
        %373 = vmatprep.subr.bf16.mxu0 0
        %374 = vmatpush2.bf16.xpose.msra.mxu0 0
        %375 = vmatprep.subr.bf16.mxu0 0
        %376 = vmatpush2.bf16.xpose.msra.mxu0 0
        %377 = vmatprep.subr.bf16.mxu0 0
        %378 = vmatpush2.bf16.xpose.msra.mxu0 0
        %379 = vmatprep.subr.bf16.mxu0 0
        %380 = vmatpush2.bf16.xpose.msra.mxu0 0
        %381 = vmatprep.subr.bf16.mxu0 0
        %382 = vmatpush2.bf16.xpose.msra.mxu0 0
        %383 = vmatprep.subr.bf16.mxu0 0
        %384 = vmatpush2.bf16.xpose.msra.mxu0 0
        %385 = vmatprep.subr.bf16.mxu0 0
        %386 = vmatpush2.bf16.xpose.msra.mxu0 0
        %387 = vmatprep.subr.bf16.mxu0 0
        %388 = vmatpush2.bf16.xpose.msra.mxu0 0
        %389 = vmatprep.mubr.bf16.mxu0 0
        %390 = vmatmul.mubr.bf16.gmra.mxu0 %v352
        %v391 = vpop.f32.mrf.mxu0
        %v392 = vadd.f32 0.0, %v391
        %v393 = vpop.f32.mrf.mxu0
        %v394 = vpop.f32.mrf.mxu0
        %v395 = vadd.f32 0.0, %v394
        %v396 = vpop.f32.mrf.mxu0
        %397 = vdwg.mxu0
        %vm398 = vcmask 130048
        %v399 = vsel %vm398, %v392, -inf
        %400 = vmax.xlane.f32.xlu0 %v399
        %v401 = vpop.xlane.xlu0 %400
        %v402 = vsel %vm398, %v395, -inf
        %403 = vmax.xlane.f32.xlu0 %v402
        %v404 = vpop.xlane.xlu0 %403
        %v405 = vsub.f32 %v392, %v401
        %v406 = vsub.f32 %v395, %v404
        %v407 = vmul.f32 %v405, 1.442695
        %v408 = vpow.pop %v407
        %v409 = vmul.f32 %v406, 1.442695
        %v410 = vpow.pop %v409
        %v411 = vsel %vm398, %v408, 0.0
        %412 = vadd.xlane.f32.xlu0 %v411
        %v413 = vpop.xlane.xlu0 %412
        %v414 = vsel %vm398, %v410, 0.0
        %415 = vadd.xlane.f32.xlu0 %v414
        %v416 = vpop.xlane.xlu0 %415
        %v417 = vrcp.pop %v413
        %v418 = vrcp.pop %v416
        %v419 = vmul.f32 %v408, %v417
        %v420 = vmul.f32 %v410, %v418
        %v421 = vpack.c.bf16 %v420, %v419
        %422 = vrot.lane.b32.xlu0 %v347, 64
        %v423 = vpop.permute.xlu0 %422
        %v426 = vsel %vm398, %v421, 0
        %428 = vmatprep.subr.bf16.mxu0 0
        %429 = vmatpush1.bf16.msra.mxu0 0
        %430 = vmatprep.subr.bf16.mxu0 0
        %431 = vmatpush1.bf16.msra.mxu0 0
        %432 = vmatprep.subr.bf16.mxu0 0
        %433 = vmatpush1.bf16.msra.mxu0 0
        %434 = vmatprep.subr.bf16.mxu0 0
        %435 = vmatpush1.bf16.msra.mxu0 0
        %436 = vmatprep.subr.bf16.mxu0 0
        %437 = vmatpush1.bf16.msra.mxu0 0
        %438 = vmatprep.subr.bf16.mxu0 0
        %439 = vmatpush1.bf16.msra.mxu0 0
        %440 = vmatprep.subr.bf16.mxu0 0
        %441 = vmatpush1.bf16.msra.mxu0 0
        %442 = vmatprep.subr.bf16.mxu0 0
        %443 = vmatpush1.bf16.msra.mxu0 %v423
        %444 = vmatprep.subr.bf16.mxu0 0
        %445 = vmatpush2.bf16.msra.mxu0 0
        %446 = vmatprep.subr.bf16.mxu0 0
        %447 = vmatpush2.bf16.msra.mxu0 0
        %448 = vmatprep.subr.bf16.mxu0 0
        %449 = vmatpush2.bf16.msra.mxu0 0
        %450 = vmatprep.subr.bf16.mxu0 0
        %451 = vmatpush2.bf16.msra.mxu0 0
        %452 = vmatprep.subr.bf16.mxu0 0
        %453 = vmatpush2.bf16.msra.mxu0 0
        %454 = vmatprep.subr.bf16.mxu0 0
        %455 = vmatpush2.bf16.msra.mxu0 0
        %456 = vmatprep.subr.bf16.mxu0 0
        %457 = vmatpush2.bf16.msra.mxu0 0
        %458 = vmatprep.subr.bf16.mxu0 0
        %459 = vmatpush2.bf16.msra.mxu0 0
        %460 = vmatprep.mubr.bf16.mxu0 0
        %461 = vmatmul.mubr.bf16.gmra.mxu0 %v426
        %v462 = vpop.f32.mrf.mxu0
        %v463 = vadd.f32 0.0, %v462
        %v464 = vpop.f32.mrf.mxu0
        %v465 = vpop.f32.mrf.mxu0
        %v466 = vadd.f32 0.0, %v465
        %v467 = vpop.f32.mrf.mxu0
        %468 = vdwg.mxu0
        %469 = vrot.lane.b32.xlu0 %v342, 120
        %v470 = vpop.permute.xlu0 %469
        %471 = vrot.lane.b32.xlu0 %v347, 88
        %v472 = vpop.permute.xlu0 %471
        %v474 = vsel %vm350, %v470, 0
        %v477 = vsel %vm350, %v472, 0
        %479 = vmatprep.subr.bf16.mxu0 0
        %480 = vmatpush1.bf16.xpose.msra.mxu0 0
        %481 = vmatprep.subr.bf16.mxu0 0
        %482 = vmatpush1.bf16.xpose.msra.mxu0 0
        %483 = vmatprep.subr.bf16.mxu0 0
        %484 = vmatpush1.bf16.xpose.msra.mxu0 0
        %485 = vmatprep.subr.bf16.mxu0 0
        %486 = vmatpush1.bf16.xpose.msra.mxu0 0
        %487 = vmatprep.subr.bf16.mxu0 0
        %488 = vmatpush1.bf16.xpose.msra.mxu0 0
        %489 = vmatprep.subr.bf16.mxu0 0
        %490 = vmatpush1.bf16.xpose.msra.mxu0 0
        %491 = vmatprep.subr.bf16.mxu0 0
        %492 = vmatpush1.bf16.xpose.msra.mxu0 0
        %493 = vmatprep.subr.bf16.mxu0 0
        %494 = vmatpush1.bf16.xpose.msra.mxu0 %v477
        %495 = vmatprep.subr.bf16.mxu0 0
        %496 = vmatpush2.bf16.xpose.msra.mxu0 0
        %497 = vmatprep.subr.bf16.mxu0 0
        %498 = vmatpush2.bf16.xpose.msra.mxu0 0
        %499 = vmatprep.subr.bf16.mxu0 0
        %500 = vmatpush2.bf16.xpose.msra.mxu0 0
        %501 = vmatprep.subr.bf16.mxu0 0
        %502 = vmatpush2.bf16.xpose.msra.mxu0 0
        %503 = vmatprep.subr.bf16.mxu0 0
        %504 = vmatpush2.bf16.xpose.msra.mxu0 0
        %505 = vmatprep.subr.bf16.mxu0 0
        %506 = vmatpush2.bf16.xpose.msra.mxu0 0
        %507 = vmatprep.subr.bf16.mxu0 0
        %508 = vmatpush2.bf16.xpose.msra.mxu0 0
        %509 = vmatprep.subr.bf16.mxu0 0
        %510 = vmatpush2.bf16.xpose.msra.mxu0 0
        %511 = vmatprep.mubr.bf16.mxu0 0
        %512 = vmatmul.mubr.bf16.gmra.mxu0 %v474
        %v513 = vpop.f32.mrf.mxu0
        %v514 = vadd.f32 0.0, %v513
        %v515 = vpop.f32.mrf.mxu0
        %v516 = vpop.f32.mrf.mxu0
        %v517 = vadd.f32 0.0, %v516
        %v518 = vpop.f32.mrf.mxu0
        %519 = vdwg.mxu0
        %v520 = vsel %vm398, %v514, -inf
        %521 = vmax.xlane.f32.xlu0 %v520
        %v522 = vpop.xlane.xlu0 %521
        %v523 = vsel %vm398, %v517, -inf
        %524 = vmax.xlane.f32.xlu0 %v523
        %v525 = vpop.xlane.xlu0 %524
        %v526 = vsub.f32 %v514, %v522
        %v527 = vsub.f32 %v517, %v525
        %v528 = vmul.f32 %v526, 1.442695
        %v529 = vpow.pop %v528
        %v530 = vmul.f32 %v527, 1.442695
        %v531 = vpow.pop %v530
        %v532 = vsel %vm398, %v529, 0.0
        %533 = vadd.xlane.f32.xlu0 %v532
        %v534 = vpop.xlane.xlu0 %533
        %v535 = vsel %vm398, %v531, 0.0
        %536 = vadd.xlane.f32.xlu0 %v535
        %v537 = vpop.xlane.xlu0 %536
        %v538 = vrcp.pop %v534
        %v539 = vrcp.pop %v537
        %v540 = vmul.f32 %v529, %v538
        %v541 = vmul.f32 %v531, %v539
        %v542 = vpack.c.bf16 %v541, %v540
        %543 = vrot.lane.b32.xlu0 %v347, 56
        %v544 = vpop.permute.xlu0 %543
        %v547 = vsel %vm398, %v542, 0
        %549 = vmatprep.subr.bf16.mxu0 0
        %550 = vmatpush1.bf16.msra.mxu0 0
        %551 = vmatprep.subr.bf16.mxu0 0
        %552 = vmatpush1.bf16.msra.mxu0 0
        %553 = vmatprep.subr.bf16.mxu0 0
        %554 = vmatpush1.bf16.msra.mxu0 0
        %555 = vmatprep.subr.bf16.mxu0 0
        %556 = vmatpush1.bf16.msra.mxu0 0
        %557 = vmatprep.subr.bf16.mxu0 0
        %558 = vmatpush1.bf16.msra.mxu0 0
        %559 = vmatprep.subr.bf16.mxu0 0
        %560 = vmatpush1.bf16.msra.mxu0 0
        %561 = vmatprep.subr.bf16.mxu0 0
        %562 = vmatpush1.bf16.msra.mxu0 0
        %563 = vmatprep.subr.bf16.mxu0 0
        %564 = vmatpush1.bf16.msra.mxu0 %v544
        %565 = vmatprep.subr.bf16.mxu0 0
        %566 = vmatpush2.bf16.msra.mxu0 0
        %567 = vmatprep.subr.bf16.mxu0 0
        %568 = vmatpush2.bf16.msra.mxu0 0
        %569 = vmatprep.subr.bf16.mxu0 0
        %570 = vmatpush2.bf16.msra.mxu0 0
        %571 = vmatprep.subr.bf16.mxu0 0
        %572 = vmatpush2.bf16.msra.mxu0 0
        %573 = vmatprep.subr.bf16.mxu0 0
        %574 = vmatpush2.bf16.msra.mxu0 0
        %575 = vmatprep.subr.bf16.mxu0 0
        %576 = vmatpush2.bf16.msra.mxu0 0
        %577 = vmatprep.subr.bf16.mxu0 0
        %578 = vmatpush2.bf16.msra.mxu0 0
        %579 = vmatprep.subr.bf16.mxu0 0
        %580 = vmatpush2.bf16.msra.mxu0 0
        %581 = vmatprep.mubr.bf16.mxu0 0
        %582 = vmatmul.mubr.bf16.gmra.mxu0 %v547
        %v583 = vpop.f32.mrf.mxu0
        %v584 = vadd.f32 0.0, %v583
        %v585 = vpop.f32.mrf.mxu0
        %v586 = vpop.f32.mrf.mxu0
        %v587 = vadd.f32 0.0, %v586
        %v588 = vpop.f32.mrf.mxu0
        %589 = vdwg.mxu0
        %590 = vrot.lane.b32.xlu0 %v342, 112
        %v591 = vpop.permute.xlu0 %590
        %592 = vrot.lane.b32.xlu0 %v347, 80
        %v593 = vpop.permute.xlu0 %592
        %v595 = vsel %vm350, %v591, 0
        %v598 = vsel %vm350, %v593, 0
        %600 = vmatprep.subr.bf16.mxu0 0
        %601 = vmatpush1.bf16.xpose.msra.mxu0 0
        %602 = vmatprep.subr.bf16.mxu0 0
        %603 = vmatpush1.bf16.xpose.msra.mxu0 0
        %604 = vmatprep.subr.bf16.mxu0 0
        %605 = vmatpush1.bf16.xpose.msra.mxu0 0
        %606 = vmatprep.subr.bf16.mxu0 0
        %607 = vmatpush1.bf16.xpose.msra.mxu0 0
        %608 = vmatprep.subr.bf16.mxu0 0
        %609 = vmatpush1.bf16.xpose.msra.mxu0 0
        %610 = vmatprep.subr.bf16.mxu0 0
        %611 = vmatpush1.bf16.xpose.msra.mxu0 0
        %612 = vmatprep.subr.bf16.mxu0 0
        %613 = vmatpush1.bf16.xpose.msra.mxu0 0
        %614 = vmatprep.subr.bf16.mxu0 0
        %615 = vmatpush1.bf16.xpose.msra.mxu0 %v598
        %616 = vmatprep.subr.bf16.mxu0 0
        %617 = vmatpush2.bf16.xpose.msra.mxu0 0
        %618 = vmatprep.subr.bf16.mxu0 0
        %619 = vmatpush2.bf16.xpose.msra.mxu0 0
        %620 = vmatprep.subr.bf16.mxu0 0
        %621 = vmatpush2.bf16.xpose.msra.mxu0 0
        %622 = vmatprep.subr.bf16.mxu0 0
        %623 = vmatpush2.bf16.xpose.msra.mxu0 0
        %624 = vmatprep.subr.bf16.mxu0 0
        %625 = vmatpush2.bf16.xpose.msra.mxu0 0
        %626 = vmatprep.subr.bf16.mxu0 0
        %627 = vmatpush2.bf16.xpose.msra.mxu0 0
        %628 = vmatprep.subr.bf16.mxu0 0
        %629 = vmatpush2.bf16.xpose.msra.mxu0 0
        %630 = vmatprep.subr.bf16.mxu0 0
        %631 = vmatpush2.bf16.xpose.msra.mxu0 0
        %632 = vmatprep.mubr.bf16.mxu0 0
        %633 = vmatmul.mubr.bf16.gmra.mxu0 %v595
        %v634 = vpop.f32.mrf.mxu0
        %v635 = vadd.f32 0.0, %v634
        %v636 = vpop.f32.mrf.mxu0
        %v637 = vpop.f32.mrf.mxu0
        %v638 = vadd.f32 0.0, %v637
        %v639 = vpop.f32.mrf.mxu0
        %640 = vdwg.mxu0
        %v641 = vsel %vm398, %v635, -inf
        %642 = vmax.xlane.f32.xlu0 %v641
        %v643 = vpop.xlane.xlu0 %642
        %v644 = vsel %vm398, %v638, -inf
        %645 = vmax.xlane.f32.xlu0 %v644
        %v646 = vpop.xlane.xlu0 %645
        %v647 = vsub.f32 %v635, %v643
        %v648 = vsub.f32 %v638, %v646
        %v649 = vmul.f32 %v647, 1.442695
        %v650 = vpow.pop %v649
        %v651 = vmul.f32 %v648, 1.442695
        %v652 = vpow.pop %v651
        %v653 = vsel %vm398, %v650, 0.0
        %654 = vadd.xlane.f32.xlu0 %v653
        %v655 = vpop.xlane.xlu0 %654
        %v656 = vsel %vm398, %v652, 0.0
        %657 = vadd.xlane.f32.xlu0 %v656
        %v658 = vpop.xlane.xlu0 %657
        %v659 = vrcp.pop %v655
        %v660 = vrcp.pop %v658
        %v661 = vmul.f32 %v650, %v659
        %v662 = vmul.f32 %v652, %v660
        %v663 = vpack.c.bf16 %v662, %v661
        %664 = vrot.lane.b32.xlu0 %v347, 48
        %v665 = vpop.permute.xlu0 %664
        %v668 = vsel %vm398, %v663, 0
        %670 = vmatprep.subr.bf16.mxu0 0
        %671 = vmatpush1.bf16.msra.mxu0 0
        %672 = vmatprep.subr.bf16.mxu0 0
        %673 = vmatpush1.bf16.msra.mxu0 0
        %674 = vmatprep.subr.bf16.mxu0 0
        %675 = vmatpush1.bf16.msra.mxu0 0
        %676 = vmatprep.subr.bf16.mxu0 0
        %677 = vmatpush1.bf16.msra.mxu0 0
        %678 = vmatprep.subr.bf16.mxu0 0
        %679 = vmatpush1.bf16.msra.mxu0 0
        %680 = vmatprep.subr.bf16.mxu0 0
        %681 = vmatpush1.bf16.msra.mxu0 0
        %682 = vmatprep.subr.bf16.mxu0 0
        %683 = vmatpush1.bf16.msra.mxu0 0
        %684 = vmatprep.subr.bf16.mxu0 0
        %685 = vmatpush1.bf16.msra.mxu0 %v665
        %686 = vmatprep.subr.bf16.mxu0 0
        %687 = vmatpush2.bf16.msra.mxu0 0
        %688 = vmatprep.subr.bf16.mxu0 0
        %689 = vmatpush2.bf16.msra.mxu0 0
        %690 = vmatprep.subr.bf16.mxu0 0
        %691 = vmatpush2.bf16.msra.mxu0 0
        %692 = vmatprep.subr.bf16.mxu0 0
        %693 = vmatpush2.bf16.msra.mxu0 0
        %694 = vmatprep.subr.bf16.mxu0 0
        %695 = vmatpush2.bf16.msra.mxu0 0
        %696 = vmatprep.subr.bf16.mxu0 0
        %697 = vmatpush2.bf16.msra.mxu0 0
        %698 = vmatprep.subr.bf16.mxu0 0
        %699 = vmatpush2.bf16.msra.mxu0 0
        %700 = vmatprep.subr.bf16.mxu0 0
        %701 = vmatpush2.bf16.msra.mxu0 0
        %702 = vmatprep.mubr.bf16.mxu0 0
        %703 = vmatmul.mubr.bf16.gmra.mxu0 %v668
        %v704 = vpop.f32.mrf.mxu0
        %v705 = vadd.f32 0.0, %v704
        %v706 = vpop.f32.mrf.mxu0
        %v707 = vpop.f32.mrf.mxu0
        %v708 = vadd.f32 0.0, %v707
        %v709 = vpop.f32.mrf.mxu0
        %710 = vdwg.mxu0
        %711 = vrot.lane.b32.xlu0 %v342, 104
        %v712 = vpop.permute.xlu0 %711
        %713 = vrot.lane.b32.xlu0 %v347, 72
        %v714 = vpop.permute.xlu0 %713
        %v716 = vsel %vm350, %v712, 0
        %v719 = vsel %vm350, %v714, 0
        %721 = vmatprep.subr.bf16.mxu0 0
        %722 = vmatpush1.bf16.xpose.msra.mxu0 0
        %723 = vmatprep.subr.bf16.mxu0 0
        %724 = vmatpush1.bf16.xpose.msra.mxu0 0
        %725 = vmatprep.subr.bf16.mxu0 0
        %726 = vmatpush1.bf16.xpose.msra.mxu0 0
        %727 = vmatprep.subr.bf16.mxu0 0
        %728 = vmatpush1.bf16.xpose.msra.mxu0 0
        %729 = vmatprep.subr.bf16.mxu0 0
        %730 = vmatpush1.bf16.xpose.msra.mxu0 0
        %731 = vmatprep.subr.bf16.mxu0 0
        %732 = vmatpush1.bf16.xpose.msra.mxu0 0
        %733 = vmatprep.subr.bf16.mxu0 0
        %734 = vmatpush1.bf16.xpose.msra.mxu0 0
        %735 = vmatprep.subr.bf16.mxu0 0
        %736 = vmatpush1.bf16.xpose.msra.mxu0 %v719
        %737 = vmatprep.subr.bf16.mxu0 0
        %738 = vmatpush2.bf16.xpose.msra.mxu0 0
        %739 = vmatprep.subr.bf16.mxu0 0
        %740 = vmatpush2.bf16.xpose.msra.mxu0 0
        %741 = vmatprep.subr.bf16.mxu0 0
        %742 = vmatpush2.bf16.xpose.msra.mxu0 0
        %743 = vmatprep.subr.bf16.mxu0 0
        %744 = vmatpush2.bf16.xpose.msra.mxu0 0
        %745 = vmatprep.subr.bf16.mxu0 0
        %746 = vmatpush2.bf16.xpose.msra.mxu0 0
        %747 = vmatprep.subr.bf16.mxu0 0
        %748 = vmatpush2.bf16.xpose.msra.mxu0 0
        %749 = vmatprep.subr.bf16.mxu0 0
        %750 = vmatpush2.bf16.xpose.msra.mxu0 0
        %751 = vmatprep.subr.bf16.mxu0 0
        %752 = vmatpush2.bf16.xpose.msra.mxu0 0
        %753 = vmatprep.mubr.bf16.mxu0 0
        %754 = vmatmul.mubr.bf16.gmra.mxu0 %v716
        %v755 = vpop.f32.mrf.mxu0
        %v756 = vadd.f32 0.0, %v755
        %v757 = vpop.f32.mrf.mxu0
        %v758 = vpop.f32.mrf.mxu0
        %v759 = vadd.f32 0.0, %v758
        %v760 = vpop.f32.mrf.mxu0
        %761 = vdwg.mxu0
        %v762 = vsel %vm398, %v756, -inf
        %763 = vmax.xlane.f32.xlu0 %v762
        %v764 = vpop.xlane.xlu0 %763
        %v765 = vsel %vm398, %v759, -inf
        %766 = vmax.xlane.f32.xlu0 %v765
        %v767 = vpop.xlane.xlu0 %766
        %v768 = vsub.f32 %v756, %v764
        %v769 = vsub.f32 %v759, %v767
        %v770 = vmul.f32 %v768, 1.442695
        %v771 = vpow.pop %v770
        %v772 = vmul.f32 %v769, 1.442695
        %v773 = vpow.pop %v772
        %v774 = vsel %vm398, %v771, 0.0
        %775 = vadd.xlane.f32.xlu0 %v774
        %v776 = vpop.xlane.xlu0 %775
        %v777 = vsel %vm398, %v773, 0.0
        %778 = vadd.xlane.f32.xlu0 %v777
        %v779 = vpop.xlane.xlu0 %778
        %v780 = vrcp.pop %v776
        %v781 = vrcp.pop %v779
        %v782 = vmul.f32 %v771, %v780
        %v783 = vmul.f32 %v773, %v781
        %v784 = vpack.c.bf16 %v783, %v782
        %785 = vrot.lane.b32.xlu0 %v347, 40
        %v786 = vpop.permute.xlu0 %785
        %v789 = vsel %vm398, %v784, 0
        %791 = vmatprep.subr.bf16.mxu0 0
        %792 = vmatpush1.bf16.msra.mxu0 0
        %793 = vmatprep.subr.bf16.mxu0 0
        %794 = vmatpush1.bf16.msra.mxu0 0
        %795 = vmatprep.subr.bf16.mxu0 0
        %796 = vmatpush1.bf16.msra.mxu0 0
        %797 = vmatprep.subr.bf16.mxu0 0
        %798 = vmatpush1.bf16.msra.mxu0 0
        %799 = vmatprep.subr.bf16.mxu0 0
        %800 = vmatpush1.bf16.msra.mxu0 0
        %801 = vmatprep.subr.bf16.mxu0 0
        %802 = vmatpush1.bf16.msra.mxu0 0
        %803 = vmatprep.subr.bf16.mxu0 0
        %804 = vmatpush1.bf16.msra.mxu0 0
        %805 = vmatprep.subr.bf16.mxu0 0
        %806 = vmatpush1.bf16.msra.mxu0 %v786
        %807 = vmatprep.subr.bf16.mxu0 0
        %808 = vmatpush2.bf16.msra.mxu0 0
        %809 = vmatprep.subr.bf16.mxu0 0
        %810 = vmatpush2.bf16.msra.mxu0 0
        %811 = vmatprep.subr.bf16.mxu0 0
        %812 = vmatpush2.bf16.msra.mxu0 0
        %813 = vmatprep.subr.bf16.mxu0 0
        %814 = vmatpush2.bf16.msra.mxu0 0
        %815 = vmatprep.subr.bf16.mxu0 0
        %816 = vmatpush2.bf16.msra.mxu0 0
        %817 = vmatprep.subr.bf16.mxu0 0
        %818 = vmatpush2.bf16.msra.mxu0 0
        %819 = vmatprep.subr.bf16.mxu0 0
        %820 = vmatpush2.bf16.msra.mxu0 0
        %821 = vmatprep.subr.bf16.mxu0 0
        %822 = vmatpush2.bf16.msra.mxu0 0
        %823 = vmatprep.mubr.bf16.mxu0 0
        %824 = vmatmul.mubr.bf16.gmra.mxu0 %v789
        %v825 = vpop.f32.mrf.mxu0
        %v826 = vadd.f32 0.0, %v825
        %v827 = vpop.f32.mrf.mxu0
        %v828 = vpop.f32.mrf.mxu0
        %v829 = vadd.f32 0.0, %v828
        %v830 = vpop.f32.mrf.mxu0
        %831 = vdwg.mxu0
        %834 = vrot.lane.b32.xlu0 %v584, 8
        %v835 = vpop.permute.xlu0 %834
        %836 = vrot.lane.b32.xlu0 %v587, 8
        %v837 = vpop.permute.xlu0 %836
        %842 = vrot.lane.b32.xlu0 %v705, 16
        %v843 = vpop.permute.xlu0 %842
        %844 = vrot.lane.b32.xlu0 %v708, 16
        %v845 = vpop.permute.xlu0 %844
        %850 = vrot.lane.b32.xlu0 %v826, 24
        %v851 = vpop.permute.xlu0 %850
        %852 = vrot.lane.b32.xlu0 %v829, 24
        %v853 = vpop.permute.xlu0 %852
        %v856 = vsel %vm350, %v463, %v835
        %v857 = vsel %vm350, %v466, %v837
        %v858 = vsel %vm398, %v856, %v843
        %v859 = vsel %vm398, %v857, %v845
        %vm860 = vcmask 195584
        %v861 = vsel %vm860, %v858, %v851
        %v862 = vsel %vm860, %v859, %v853
        %vm863 = vcmask 261120
        %864 = vst.msk [vmem:[#allocation3] sm:$0xff] %vm863, %v861
        %865 = vst.msk [vmem:[#allocation3 + $0x8] sm:$0xff] %vm863, %v862
        %v866 = vld [vmem:[#allocation3] sm:$0xff]
        %v867 = vld [vmem:[#allocation3 + $0x8] sm:$0xff]
        %v868 = vpack.c.bf16 %v867, %v866
        %v869 = vld [vmem:[%s3] sm:$0xf]
        %v870 = vld [vmem:[%s3 + $0x4] sm:$0xf]
        %v871 = vld [vmem:[%s3 + $0x8] sm:$0xf]
        %v872 = vld [vmem:[%s3 + $0xc] sm:$0xf]
        %v873 = vld [vmem:[%s4] sm:$0x1]
        %v875 = vlaneseq
        %v876 = vshrl.u32 %v875, 7
        %v877 = vsub.s32 0, %v876
        %v878 = vrot.slane %v873, %v877
        %v884 = vunpack.c.l.b16 %v869
        %v885 = vunpack.c.l.b16 %v870
        %v886 = vunpack.c.l.b16 %v871
        %v887 = vunpack.c.l.b16 %v872
        %v888 = vpack.c.b16 %v885, %v884
        %v889 = vpack.c.b16 %v887, %v886
        %v893 = vsel %vm863, %v868, 0
        %895 = vmatprep.subr.bf16.mxu0 0
        %896 = vmatpush1.bf16.msra.mxu0 0
        %897 = vmatprep.subr.bf16.mxu0 0
        %898 = vmatpush1.bf16.msra.mxu0 0
        %899 = vmatprep.subr.bf16.mxu0 0
        %900 = vmatpush1.bf16.msra.mxu0 0
        %901 = vmatprep.subr.bf16.mxu0 0
        %902 = vmatpush1.bf16.msra.mxu0 0
        %903 = vmatprep.subr.bf16.mxu0 0
        %904 = vmatpush1.bf16.msra.mxu0 0
        %905 = vmatprep.subr.bf16.mxu0 0
        %906 = vmatpush1.bf16.msra.mxu0 0
        %907 = vmatprep.subr.bf16.mxu0 0
        %908 = vmatpush1.bf16.msra.mxu0 %v889
        %909 = vmatprep.subr.bf16.mxu0 0
        %910 = vmatpush1.bf16.msra.mxu0 %v888
        %911 = vmatprep.subr.bf16.mxu0 0
        %912 = vmatpush2.bf16.msra.mxu0 0
        %913 = vmatprep.subr.bf16.mxu0 0
        %914 = vmatpush2.bf16.msra.mxu0 0
        %915 = vmatprep.subr.bf16.mxu0 0
        %916 = vmatpush2.bf16.msra.mxu0 0
        %917 = vmatprep.subr.bf16.mxu0 0
        %918 = vmatpush2.bf16.msra.mxu0 0
        %919 = vmatprep.subr.bf16.mxu0 0
        %920 = vmatpush2.bf16.msra.mxu0 0
        %921 = vmatprep.subr.bf16.mxu0 0
        %922 = vmatpush2.bf16.msra.mxu0 0
        %923 = vmatprep.subr.bf16.mxu0 0
        %924 = vmatpush2.bf16.msra.mxu0 0
        %925 = vmatprep.subr.bf16.mxu0 0
        %926 = vmatpush2.bf16.msra.mxu0 0
        %927 = vmatprep.mubr.bf16.mxu0 0
        %928 = vmatmul.mubr.bf16.gmra.mxu0 %v893
        %v929 = vpop.f32.mrf.mxu0
        %v930 = vadd.f32 %v878, %v929
        %v931 = vpop.f32.mrf.mxu0
        %v932 = vpop.f32.mrf.mxu0
        %v933 = vadd.f32 %v878, %v932
        %v934 = vpop.f32.mrf.mxu0
        %935 = vdwg.mxu0
        %936 = vst.msk [vmem:[%s231] sm:$0xff] %vm863, %v930
        %937 = vst.msk [vmem:[%s231 + $0x8] sm:$0xff] %vm863, %v933
        %s938 = sand.u32 %s151, 1
        %s939 = scalar_lea.sflag [#allocation5], %s938
        %s940 = sand.u32 %s151, 1
        %s941 = smul.addr %s940, 16
        %s942 = scalar_lea.vmem [#allocation4], %s941
        // Predicated region
        $region45: #{vit_attention.1} parent=39 // pred_check
          %p943 = pneg %p161
        $region46: #{vit_attention.1} parent=39 // pred_check_branch
          %945 = sbr.rel (%p943) target = $region48
        $region47: #{vit_attention.1} parent=39 // pred_region
          %s946 = smul.u32 2, %s24
          %s948 = ssub.s32 256, 256
          %949 = vsyncadd %s939, %s948
          %s950 = smul.addr %s23, 2
          %s951 = sadd.s32 %s946, %s950
          %s952 = smul.addr %s951, 128
          %s953 = scalar_lea.hbm %s5, %s952
          %s954 = sshll.u32 %s942, 4
          %s955 = int_to_ptr.vmem [resolvable:$true] %s954
          %960 = dma.vmem_to_hbm [thread:$0]  %s955, 256, %s953, %s939, 128, 128, 8
        $region48: #{vit_attention.1} parent=39 // pred_fallthru
          _
      $region40: #{vit_attention.1} parent=5 // pred_fallthru
        _
      %p961 = scmp.le.s32.totalorder 2, %s14
      // Predicated region
      $region49: #{vit_attention.1} parent=5 // pred_check
        %p962 = pneg %p961
      $region50: #{vit_attention.1} parent=5 // pred_check_branch
        %964 = sbr.rel (%p962) target = $region52
      $region51: #{vit_attention.1} parent=5 // pred_region
        %s965 = ssub.s32 %s14, 2
        // Predicated region
        $region53: #{vit_attention.1} parent=51 // pred_check
          %p966 = pneg %p167
        $region54: #{vit_attention.1} parent=51 // pred_check_branch
          %968 = sbr.rel (%p966) target = $region56
        $region55: #{vit_attention.1} parent=51 // pred_region
          %s969 = sand.u32 %s152, 1
          %s970 = scalar_lea.sflag [#allocation5], %s969
          %s971 = sand.u32 %s152, 1
          %s972 = smul.addr %s971, 16
          %s973 = scalar_lea.vmem [#allocation4], %s972
          %974 = dma.done %s970, 256
        $region56: #{vit_attention.1} parent=51 // pred_fallthru
          _
      $region52: #{vit_attention.1} parent=5 // pred_fallthru
        _
    $region6: #{vit_attention.1} parent=1 // loop_footer
      %s18 = sadd.s32 1, %s14
    $region7: #{vit_attention.1} parent=1 // loop_footer_branch
      %13 = sbr.rel target = $region3
    $region8: #{vit_attention.1} parent=1 // loop_exit
      _
    %975 = vsyncpa [#allocation5], 1
    %s976 = scalar_lea.sflag [#allocation5], 1
    %977 = vsyncpa %s976, 1

</llo_original>
